<compile_context>
chip_gen: v6e
topology: v6e:2x2x1
jax: 0.10.0
libtpu: 0.0.40
codegen_flags: <defaults>
</compile_context>

<pallas_src>
import functools

import jax
import jax.numpy as jnp
from jax.experimental import pallas as pl
from jax.experimental.pallas import tpu as pltpu

LN_EPS = 1e-5


def _round_up(x, m):
    return ((x + m - 1) // m) * m


def _layernorm(x, gamma=None, beta=None, eps=LN_EPS):
    # f32 LayerNorm statistics; variance via E[x^2] - mean^2 (single pass,
    # clamped at 0 against cancellation), matching torch.nn.LayerNorm (biased
    # variance, eps inside the rsqrt).
    mu = jnp.mean(x, axis=-1, keepdims=True)
    var = jnp.maximum(jnp.mean(x * x, axis=-1, keepdims=True) - mu * mu, 0.0)
    y = (x - mu) * jax.lax.rsqrt(var + eps)
    if gamma is not None:
        y = y * gamma + beta
    return y


# ----------------------------------------------------------------------------
# Kernel A: per-target-layer FCBlock hidden activation + predicted biases.
#   grid = (num_target_layers L,).  Params stacked on a leading L axis.
#   Outputs: h (L, B, hh) in bf16 (consumed by kernel B) and the predicted
#   biases (L, B, oc_max) in f32.
# ----------------------------------------------------------------------------
def _hyper_hidden_kernel(n_hyper_hidden,
                         x_ref,                               # (B, hyper_in) f32
                         w0_ref, b0_ref, g0_ref, be0_ref,     # (1,hyper_in,hh) bf16, (1,1,hh) f32 x3
                         wh_ref, bh_ref, gh_ref, beh_ref,     # (1,Lh,hh,hh) bf16, (1,Lh,1,hh) f32 x3
                         wlb_ref, blb_ref,                    # (1,hh,oc_max) bf16, (1,1,oc_max) f32
                         h_out_ref,                           # (1, B, hh) bf16
                         bias_out_ref):                       # (1, B, oc_max) f32
    h = jnp.dot(x_ref[...].astype(jnp.bfloat16), w0_ref[0],
                preferred_element_type=jnp.float32) + b0_ref[0]
    h = jnp.maximum(_layernorm(h, g0_ref[0], be0_ref[0]), 0.0)
    for l in range(n_hyper_hidden):         # static unroll (small count)
        h = jnp.dot(h.astype(jnp.bfloat16), wh_ref[0, l],
                    preferred_element_type=jnp.float32) + bh_ref[0, l]
        h = jnp.maximum(_layernorm(h, gh_ref[0, l], beh_ref[0, l]), 0.0)
    h_bf = h.astype(jnp.bfloat16)
    h_out_ref[0] = h_bf
    # bias-producing columns of the last hyper Linear (tiny: B x oc_max)
    bias_out_ref[0] = jnp.dot(h_bf, wlb_ref[0],
                              preferred_element_type=jnp.float32) + blb_ref[0]


def _run_hyper_hidden(params, hyper_input, n_hyper_hidden):
    B, hyper_in = hyper_input.shape
    L, _, hh = params["w0"].shape
    Lh = params["wh"].shape[1]
    oc_max = params["wl_b"].shape[2]
    kernel = functools.partial(_hyper_hidden_kernel, n_hyper_hidden)
    return pl.pallas_call(
        kernel,
        out_shape=(jax.ShapeDtypeStruct((L, B, hh), jnp.bfloat16),
                   jax.ShapeDtypeStruct((L, B, oc_max), jnp.float32)),
        grid=(L,),
        in_specs=[
            pl.BlockSpec((B, hyper_in), lambda l: (0, 0)),
            pl.BlockSpec((1, hyper_in, hh), lambda l: (l, 0, 0)),
            pl.BlockSpec((1, 1, hh), lambda l: (l, 0, 0)),
            pl.BlockSpec((1, 1, hh), lambda l: (l, 0, 0)),
            pl.BlockSpec((1, 1, hh), lambda l: (l, 0, 0)),
            pl.BlockSpec((1, Lh, hh, hh), lambda l: (l, 0, 0, 0)),
            pl.BlockSpec((1, Lh, 1, hh), lambda l: (l, 0, 0, 0)),
            pl.BlockSpec((1, Lh, 1, hh), lambda l: (l, 0, 0, 0)),
            pl.BlockSpec((1, Lh, 1, hh), lambda l: (l, 0, 0, 0)),
            pl.BlockSpec((1, hh, oc_max), lambda l: (l, 0, 0)),
            pl.BlockSpec((1, 1, oc_max), lambda l: (l, 0, 0)),
        ],
        out_specs=(pl.BlockSpec((1, B, hh), lambda l: (l, 0, 0)),
                   pl.BlockSpec((1, B, oc_max), lambda l: (l, 0, 0))),
        compiler_params=pltpu.CompilerParams(
            dimension_semantics=("parallel",),
            vmem_limit_bytes=32 * 1024 * 1024),
    )(hyper_input,
      params["w0"], params["b0"], params["g0"], params["be0"],
      params["wh"], params["bh"], params["gh"], params["beh"],
      params["wl_b"], params["bl_b"])


# ----------------------------------------------------------------------------
# Kernel B (per target layer): the big (B, hh) @ (hh, oc*ic) matmul that
# produces the predicted weights, tiled along the hypo-param column axis.
# The single grid axis is "parallel" (v7x megacore-shardable).
# ----------------------------------------------------------------------------
def _hypo_weight_kernel(h_ref,        # (1, B, hh) bf16 (resident across tiles)
                        wl_ref,       # (hh, TILE) bf16
                        bl_ref,       # (1, TILE) f32
                        out_ref):     # (B, TILE) bf16
    acc = jnp.dot(h_ref[0], wl_ref[...], preferred_element_type=jnp.float32)
    out_ref[...] = (acc + bl_ref[...]).astype(out_ref.dtype)


def _run_hypo_weights(h_all, wl_w, bl_w, layer_idx, tile_cols):
    L, B, hh = h_all.shape
    _, p_pad = wl_w.shape
    grid = (p_pad // tile_cols,)
    return pl.pallas_call(
        _hypo_weight_kernel,
        out_shape=jax.ShapeDtypeStruct((B, p_pad), jnp.bfloat16),
        grid=grid,
        in_specs=[
            pl.BlockSpec((1, B, hh), lambda pj, _l=layer_idx: (_l, 0, 0)),
            pl.BlockSpec((hh, tile_cols), lambda pj: (0, pj)),
            pl.BlockSpec((1, tile_cols), lambda pj: (0, pj)),
        ],
        out_specs=pl.BlockSpec((B, tile_cols), lambda pj: (0, pj)),
        compiler_params=pltpu.CompilerParams(
            dimension_semantics=("parallel",),
            vmem_limit_bytes=32 * 1024 * 1024),
    )(h_all, wl_w, bl_w)


# ----------------------------------------------------------------------------
# Kernel C: the whole predicted network fused into one kernel.
#   grid = (B, N-tiles).  The activation tile stays in VMEM across all layers;
#   per-layer (w, b) blocks are invariant in the N axis so they stay resident.
# ----------------------------------------------------------------------------
def _predicted_net_kernel(has_nl_flags, *refs):
    x_ref = refs[0]            # (1, TILE_N, in_ch) f32
    out_ref = refs[-1]         # (1, TILE_N, out_ch) f32
    wb = refs[1:-1]            # (1, oc, ic) bf16, (1, 1, oc) f32 per layer

    act = x_ref[0]             # (TILE_N, in_ch) f32
    for i, has_nl in enumerate(has_nl_flags):
        w = wb[2 * i][0]       # (oc, ic) bf16
        b = wb[2 * i + 1][0]   # (1, oc)  f32
        # BatchLinear: x @ w^T via a last-dim/last-dim contraction (no explicit
        # transpose); bf16 operands, f32 accumulation.
        y = jax.lax.dot_general(
            act.astype(jnp.bfloat16), w,
            dimension_numbers=(((1,), (1,)), ((), ())),
            preferred_element_type=jnp.float32) + b
        if has_nl:
            # LayerNorm(out_ch, elementwise_affine=False) + ReLU
            y = jnp.maximum(_layernorm(y), 0.0)
        act = y
    # Note: last dim = out_ch (tiny) -> masked stores; padding to 128 would be
    # lane-dense but breaks the "LayerNorm over exactly out_ch" semantics, and
    # the final tensor is small, so it is left as-is.
    out_ref[0] = act.astype(out_ref.dtype)


def _run_predicted_net(net, x, tile_n=1024):
    """net: list of (weights (B, oc, ic) bf16, biases (B, 1, oc) f32, has_norm_relu)."""
    B, N, in_ch = x.shape
    out_ch = net[-1][0].shape[1]
    TILE_N = N if N <= tile_n else tile_n   # multiple of 8 (1024) or full N
    grid = (B, pl.cdiv(N, TILE_N))

    in_specs = [pl.BlockSpec((1, TILE_N, in_ch), lambda b, nt: (b, nt, 0))]
    args = [x]
    flags = []
    for (w, bias, has_nl) in net:
        w = w.astype(jnp.bfloat16)          # no-op for kernel-B outputs
        bias = bias.astype(jnp.float32)
        oc, ic = w.shape[1], w.shape[2]
        in_specs.append(pl.BlockSpec((1, oc, ic), lambda b, nt: (b, 0, 0)))
        in_specs.append(pl.BlockSpec((1, 1, oc), lambda b, nt: (b, 0, 0)))
        args.extend([w, bias])
        flags.append(bool(has_nl))

    kernel = functools.partial(_predicted_net_kernel, tuple(flags))
    return pl.pallas_call(
        kernel,
        out_shape=jax.ShapeDtypeStruct((B, N, out_ch), jnp.float32),
        grid=grid,
        in_specs=in_specs,
        out_specs=pl.BlockSpec((1, TILE_N, out_ch), lambda b, nt: (b, nt, 0)),
        compiler_params=pltpu.CompilerParams(
            dimension_semantics=("parallel", "parallel"),
            vmem_limit_bytes=32 * 1024 * 1024),
    )(*args)


# ----------------------------------------------------------------------------
# Deterministic parameter initialization (kaiming-normal-like, synthetic).
# ----------------------------------------------------------------------------
def _kaiming(key, out_dim, in_dim, scale=1.0):
    std = scale * (2.0 / in_dim) ** 0.5
    return (std * jax.random.normal(key, (out_dim, in_dim))).astype(jnp.float32)


def _linear_bias(key, out_dim, in_dim):
    bound = 1.0 / (in_dim ** 0.5)
    return jax.random.uniform(key, (1, out_dim), jnp.float32, -bound, bound)


# ----------------------------------------------------------------------------
# HyperFC in JAX.
# ----------------------------------------------------------------------------
class HyperFC:
    def __init__(self, key, hyper_in_ch, hyper_num_hidden_layers, hyper_hidden_ch,
                 hidden_ch, num_hidden_layers, in_ch, out_ch,
                 outermost_linear=False):
        self.hyper_num_hidden_layers = hyper_num_hidden_layers
        self.hyper_hidden_ch = hyper_hidden_ch
        self.hyper_in_ch = hyper_in_ch

        # (in_ch, out_ch, followed_by_layernorm_relu) per predicted layer
        self.layer_dims = [(in_ch, hidden_ch, True)]
        for _ in range(num_hidden_layers):
            self.layer_dims.append((hidden_ch, hidden_ch, True))
        self.layer_dims.append((hidden_ch, out_ch, not outermost_linear))

        L = len(self.layer_dims)
        Lh = max(hyper_num_hidden_layers, 1)   # dummy slot when count == 0
        hh = hyper_hidden_ch
        oc_max = max(oc for _, oc, _ in self.layer_dims)
        self.oc_max = oc_max

        # Per-layer tiling of the weight-producing columns of the last hyper
        # Linear (no padding to a global max; tiles up to 4096 columns).
        TILE_MAX_P = 4096
        self.wtile, self.wpad = [], []
        for ic, oc, _ in self.layer_dims:
            pw = ic * oc
            t = min(TILE_MAX_P, _round_up(pw, 128))
            self.wtile.append(t)
            self.wpad.append(_round_up(pw, t))

        w0s, b0s, whs, bhs, wlbs, blbs = [], [], [], [], [], []
        self.wl_w, self.bl_w = [], []          # per-layer (hh, P_pad) bf16 / (1, P_pad) f32
        for i, (ic, oc, _) in enumerate(self.layer_dims):
            lkey = jax.random.fold_in(key, i)
            keys = jax.random.split(lkey, 4 + 2 * Lh)
            w0s.append(_kaiming(keys[0], hh, hyper_in_ch).T.astype(jnp.bfloat16))
            b0s.append(_linear_bias(keys[1], hh, hyper_in_ch))
            whs.append(jnp.stack(
                [_kaiming(keys[4 + 2 * l], hh, hh).T for l in range(Lh)]
            ).astype(jnp.bfloat16))
            bhs.append(jnp.stack(
                [_linear_bias(keys[5 + 2 * l], hh, hh) for l in range(Lh)]))
            # last_hyper_layer_init: kaiming * 0.1.  Columns are ordered exactly
            # as the PyTorch flat hypo-params: ic*oc weight columns, then oc
            # bias columns.  Stored pre-transposed (hh, cols) in bf16.
            pw = ic * oc
            wl = _kaiming(keys[2], pw + oc, hh, scale=0.1)    # (P, hh)
            bl = _linear_bias(keys[3], pw + oc, hh)           # (1, P)
            pad = self.wpad[i] - pw
            self.wl_w.append(jnp.pad(wl[:pw].T, ((0, 0), (0, pad))).astype(jnp.bfloat16))
            self.bl_w.append(jnp.pad(bl[:, :pw], ((0, 0), (0, pad))))
            wlbs.append(jnp.pad(wl[pw:].T, ((0, 0), (0, oc_max - oc))).astype(jnp.bfloat16))
            blbs.append(jnp.pad(bl[:, pw:], ((0, 0), (0, oc_max - oc))))

        self.params = {
            "w0": jnp.stack(w0s),                              # (L, hyper_in, hh) bf16
            "b0": jnp.stack(b0s),                              # (L, 1, hh) f32
            "g0": jnp.ones((L, 1, hh), jnp.float32),
            "be0": jnp.zeros((L, 1, hh), jnp.float32),
            "wh": jnp.stack(whs),                              # (L, Lh, hh, hh) bf16
            "bh": jnp.stack(bhs),                              # (L, Lh, 1, hh) f32
            "gh": jnp.ones((L, Lh, 1, hh), jnp.float32),
            "beh": jnp.zeros((L, Lh, 1, hh), jnp.float32),
            "wl_b": jnp.stack(wlbs),                           # (L, hh, oc_max) bf16
            "bl_b": jnp.stack(blbs),                           # (L, 1, oc_max) f32
        }

    def forward(self, hyper_input):
        """Returns the predicted network: list of (weights, biases, has_norm_relu)."""
        h_all, bias_all = _run_hyper_hidden(
            self.params, hyper_input, self.hyper_num_hidden_layers)
        B = hyper_input.shape[0]
        net = []
        for l, (ic, oc, has_nl) in enumerate(self.layer_dims):
            w_flat = _run_hypo_weights(
                h_all, self.wl_w[l], self.bl_w[l], l, self.wtile[l])   # (B, P_pad) bf16
            weights = w_flat[:, : ic * oc].reshape(B, oc, ic)          # bf16 (B, out, in)
            biases = bias_all[l, :, :oc].reshape(B, 1, oc)             # f32 (B, 1, out)
            net.append((weights, biases, has_nl))
        return net

    @staticmethod
    def apply_predicted_net(net, x):
        """Run the predicted nn.Sequential on x of shape (B, N, in_ch)."""
        return _run_predicted_net(net, x)


# ----------------------------------------------------------------------------
# Pure-JAX reference (same bf16 matmul / f32-accumulate precision as kernels).
# ----------------------------------------------------------------------------
def _reference_forward(model, hyper_input, x):
    p = model.params
    nets = []
    B = hyper_input.shape[0]
    for l, (ic, oc, has_nl) in enumerate(model.layer_dims):
        h = jnp.dot(hyper_input.astype(jnp.bfloat16), p["w0"][l],
                    preferred_element_type=jnp.float32) + p["b0"][l]
        h = jnp.maximum(_layernorm(h, p["g0"][l], p["be0"][l]), 0.0)
        for k in range(model.hyper_num_hidden_layers):
            h = jnp.dot(h.astype(jnp.bfloat16), p["wh"][l, k],
                        preferred_element_type=jnp.float32) + p["bh"][l, k]
            h = jnp.maximum(_layernorm(h, p["gh"][l, k], p["beh"][l, k]), 0.0)
        h = h.astype(jnp.bfloat16)
        pw = ic * oc
        w_flat = jnp.dot(h, model.wl_w[l][:, :pw],
                         preferred_element_type=jnp.float32) + model.bl_w[l][:, :pw]
        bias = jnp.dot(h, p["wl_b"][l, :, :oc],
                       preferred_element_type=jnp.float32) + p["bl_b"][l, :, :oc]
        nets.append((w_flat.reshape(B, oc, ic), bias.reshape(B, 1, oc), has_nl))
    act = x
    for (w, b, has_nl) in nets:
        y = jnp.einsum("bni,boi->bno", act.astype(jnp.bfloat16),
                       w.astype(jnp.bfloat16),
                       preferred_element_type=jnp.float32) + b
        if has_nl:
            y = jnp.maximum(_layernorm(y), 0.0)
        act = y
    return act


if __name__ == "__main__":
    key = jax.random.PRNGKey(0)
    k_param, k_hyper, k_x = jax.random.split(key, 3)

    # small shapes consistent with the module
    hyper_in_ch = 8
    hyper_num_hidden_layers = 1
    hyper_hidden_ch = 32
    hidden_ch = 32
    num_hidden_layers = 1
    in_ch = 4
    out_ch = 3
    B, N = 2, 8

    model = HyperFC(k_param, hyper_in_ch, hyper_num_hidden_layers, hyper_hidden_ch,
                    hidden_ch, num_hidden_layers, in_ch, out_ch,
                    outermost_linear=False)

    hyper_input = jax.random.normal(k_hyper, (B, hyper_in_ch), jnp.float32)
    x = jax.random.normal(k_x, (B, N, in_ch), jnp.float32)

    # HyperFC.forward: predict the fully-connected network from hyper_input
    net = model.forward(hyper_input)
    jax.block_until_ready([w for (w, _, _) in net] + [b for (_, b, _) in net])

    # Run the predicted network (fused BatchLinear + LN + ReLU kernel)
    y = HyperFC.apply_predicted_net(net, x)
    jax.block_until_ready(y)

    assert y.shape == (B, N, out_ch)
    assert all(w.shape == (B, oc, ic) and b.shape == (B, 1, oc)
               for (w, b, _), (ic, oc, _) in zip(net, model.layer_dims))

    # Correctness vs. a pure-JAX reference using the same bf16/f32 precision.
    y_ref = _reference_forward(model, hyper_input, x)
    jax.block_until_ready(y_ref)
    assert bool(jnp.allclose(y, y_ref, atol=5e-2, rtol=5e-2)), "mismatch vs reference"

    print("KERNEL_OK")
</pallas_src>

<mosaic_0001>
module attributes {stable_mosaic.version = 11 : i64} {
  func.func @_hyper_hidden_kernel(%arg0: i32, %arg1: memref<2x8xf32, #tpu.memory_space<vmem>>, %arg2: memref<1x8x32xbf16, #tpu.memory_space<vmem>>, %arg3: memref<1x1x32xf32, #tpu.memory_space<vmem>>, %arg4: memref<1x1x32xf32, #tpu.memory_space<vmem>>, %arg5: memref<1x1x32xf32, #tpu.memory_space<vmem>>, %arg6: memref<1x1x32x32xbf16, #tpu.memory_space<vmem>>, %arg7: memref<1x1x1x32xf32, #tpu.memory_space<vmem>>, %arg8: memref<1x1x1x32xf32, #tpu.memory_space<vmem>>, %arg9: memref<1x1x1x32xf32, #tpu.memory_space<vmem>>, %arg10: memref<1x32x32xbf16, #tpu.memory_space<vmem>>, %arg11: memref<1x1x32xf32, #tpu.memory_space<vmem>>, %arg12: memref<1x2x32xbf16, #tpu.memory_space<vmem>>, %arg13: memref<1x2x32xf32, #tpu.memory_space<vmem>>) attributes {dimension_semantics = [#tpu.dimension_semantics<parallel>], iteration_bounds = array<i64: 3>, scalar_prefetch = 0 : i64, scratch_operands = 0 : i64, tpu.core_type = #tpu.core_type<tc>, window_params = [{pipeline_mode = #tpu.pipeline_mode<synchronous>, transform_indices = @transform_0, window_bounds = array<i64: 2, 8>}, {transform_indices = @transform_1, window_bounds = array<i64: 1, 8, 32>}, {transform_indices = @transform_2, window_bounds = array<i64: 1, 1, 32>}, {transform_indices = @transform_3, window_bounds = array<i64: 1, 1, 32>}, {transform_indices = @transform_4, window_bounds = array<i64: 1, 1, 32>}, {transform_indices = @transform_5, window_bounds = array<i64: 1, 1, 32, 32>}, {transform_indices = @transform_6, window_bounds = array<i64: 1, 1, 1, 32>}, {transform_indices = @transform_7, window_bounds = array<i64: 1, 1, 1, 32>}, {transform_indices = @transform_8, window_bounds = array<i64: 1, 1, 1, 32>}, {transform_indices = @transform_9, window_bounds = array<i64: 1, 32, 32>}, {transform_indices = @transform_10, window_bounds = array<i64: 1, 1, 32>}, {transform_indices = @transform_11, window_bounds = array<i64: 1, 2, 32>}, {transform_indices = @transform_12, window_bounds = array<i64: 1, 2, 32>}]} {
    %c0 = arith.constant 0 : index
    %c0_0 = arith.constant 0 : index
    %0 = vector.load %arg1[%c0, %c0_0] : memref<2x8xf32, #tpu.memory_space<vmem>>, vector<2x8xf32>
    %1 = arith.truncf %0 : vector<2x8xf32> to vector<2x8xbf16>
    %c0_1 = arith.constant 0 : index
    %c0_2 = arith.constant 0 : index
    %c0_3 = arith.constant 0 : index
    %2 = vector.load %arg2[%c0_1, %c0_2, %c0_3] : memref<1x8x32xbf16, #tpu.memory_space<vmem>>, vector<1x8x32xbf16>
    %3 = vector.shape_cast %2 : vector<1x8x32xbf16> to vector<8x32xbf16>
    %cst = arith.constant dense<0.000000e+00> : vector<2x32xf32>
    %4 = tpu.matmul %1, %3, %cst {dimension_numbers = #tpu.dot_dimension_numbers<[1], [0], [0], [1], [0, 0, 1, 1], [], []>} : vector<2x8xbf16>, vector<8x32xbf16>, vector<2x32xf32> -> vector<2x32xf32>
    %c0_4 = arith.constant 0 : index
    %c0_5 = arith.constant 0 : index
    %c0_6 = arith.constant 0 : index
    %5 = vector.load %arg3[%c0_4, %c0_5, %c0_6] : memref<1x1x32xf32, #tpu.memory_space<vmem>>, vector<1x1x32xf32>
    %6 = vector.shape_cast %5 : vector<1x1x32xf32> to vector<1x32xf32>
    %7 = vector.broadcast %6 : vector<1x32xf32> to vector<2x32xf32>
    %8 = arith.addf %4, %7 : vector<2x32xf32>
    %c0_7 = arith.constant 0 : index
    %c0_8 = arith.constant 0 : index
    %c0_9 = arith.constant 0 : index
    %9 = vector.load %arg4[%c0_7, %c0_8, %c0_9] : memref<1x1x32xf32, #tpu.memory_space<vmem>>, vector<1x1x32xf32>
    %10 = vector.shape_cast %9 : vector<1x1x32xf32> to vector<1x32xf32>
    %c0_10 = arith.constant 0 : index
    %c0_11 = arith.constant 0 : index
    %c0_12 = arith.constant 0 : index
    %11 = vector.load %arg5[%c0_10, %c0_11, %c0_12] : memref<1x1x32xf32, #tpu.memory_space<vmem>>, vector<1x1x32xf32>
    %12 = vector.shape_cast %11 : vector<1x1x32xf32> to vector<1x32xf32>
    %cst_13 = arith.constant dense<0.000000e+00> : vector<2xf32>
    %13 = vector.multi_reduction <add>, %8, %cst_13 [1] : vector<2x32xf32> to vector<2xf32>
    %14 = vector.shape_cast %13 : vector<2xf32> to vector<2x1xf32>
    %cst_14 = arith.constant 3.200000e+01 : f32
    %15 = vector.broadcast %cst_14 : f32 to vector<2x1xf32>
    %16 = arith.divf %14, %15 : vector<2x1xf32>
    %17 = arith.mulf %8, %8 : vector<2x32xf32>
    %cst_15 = arith.constant dense<0.000000e+00> : vector<2xf32>
    %18 = vector.multi_reduction <add>, %17, %cst_15 [1] : vector<2x32xf32> to vector<2xf32>
    %19 = vector.shape_cast %18 : vector<2xf32> to vector<2x1xf32>
    %cst_16 = arith.constant 3.200000e+01 : f32
    %20 = vector.broadcast %cst_16 : f32 to vector<2x1xf32>
    %21 = arith.divf %19, %20 : vector<2x1xf32>
    %22 = arith.mulf %16, %16 : vector<2x1xf32>
    %23 = arith.subf %21, %22 : vector<2x1xf32>
    %cst_17 = arith.constant 0.000000e+00 : f32
    %24 = vector.broadcast %cst_17 : f32 to vector<2x1xf32>
    %25 = arith.maximumf %23, %24 : vector<2x1xf32>
    %26 = vector.broadcast %16 : vector<2x1xf32> to vector<2x32xf32>
    %27 = arith.subf %8, %26 : vector<2x32xf32>
    %cst_18 = arith.constant 9.99999974E-6 : f32
    %28 = vector.broadcast %cst_18 : f32 to vector<2x1xf32>
    %29 = arith.addf %25, %28 : vector<2x1xf32>
    %30 = math.rsqrt %29 : vector<2x1xf32>
    %31 = vector.broadcast %30 : vector<2x1xf32> to vector<2x32xf32>
    %32 = arith.mulf %27, %31 : vector<2x32xf32>
    %33 = vector.broadcast %10 : vector<1x32xf32> to vector<2x32xf32>
    %34 = arith.mulf %32, %33 : vector<2x32xf32>
    %35 = vector.broadcast %12 : vector<1x32xf32> to vector<2x32xf32>
    %36 = arith.addf %34, %35 : vector<2x32xf32>
    %cst_19 = arith.constant 0.000000e+00 : f32
    %37 = vector.broadcast %cst_19 : f32 to vector<2x32xf32>
    %38 = arith.maximumf %36, %37 : vector<2x32xf32>
    %39 = arith.truncf %38 : vector<2x32xf32> to vector<2x32xbf16>
    %c0_20 = arith.constant 0 : index
    %c0_21 = arith.constant 0 : index
    %c0_22 = arith.constant 0 : index
    %c0_23 = arith.constant 0 : index
    %40 = vector.load %arg6[%c0_20, %c0_21, %c0_22, %c0_23] : memref<1x1x32x32xbf16, #tpu.memory_space<vmem>>, vector<1x1x32x32xbf16>
    %41 = vector.shape_cast %40 : vector<1x1x32x32xbf16> to vector<32x32xbf16>
    %cst_24 = arith.constant dense<0.000000e+00> : vector<2x32xf32>
    %42 = tpu.matmul %39, %41, %cst_24 {dimension_numbers = #tpu.dot_dimension_numbers<[1], [0], [0], [1], [0, 0, 1, 1], [], []>} : vector<2x32xbf16>, vector<32x32xbf16>, vector<2x32xf32> -> vector<2x32xf32>
    %c0_25 = arith.constant 0 : index
    %c0_26 = arith.constant 0 : index
    %c0_27 = arith.constant 0 : index
    %c0_28 = arith.constant 0 : index
    %43 = vector.load %arg7[%c0_25, %c0_26, %c0_27, %c0_28] : memref<1x1x1x32xf32, #tpu.memory_space<vmem>>, vector<1x1x1x32xf32>
    %44 = vector.shape_cast %43 : vector<1x1x1x32xf32> to vector<1x32xf32>
    %45 = vector.broadcast %44 : vector<1x32xf32> to vector<2x32xf32>
    %46 = arith.addf %42, %45 : vector<2x32xf32>
    %c0_29 = arith.constant 0 : index
    %c0_30 = arith.constant 0 : index
    %c0_31 = arith.constant 0 : index
    %c0_32 = arith.constant 0 : index
    %47 = vector.load %arg8[%c0_29, %c0_30, %c0_31, %c0_32] : memref<1x1x1x32xf32, #tpu.memory_space<vmem>>, vector<1x1x1x32xf32>
    %48 = vector.shape_cast %47 : vector<1x1x1x32xf32> to vector<1x32xf32>
    %c0_33 = arith.constant 0 : index
    %c0_34 = arith.constant 0 : index
    %c0_35 = arith.constant 0 : index
    %c0_36 = arith.constant 0 : index
    %49 = vector.load %arg9[%c0_33, %c0_34, %c0_35, %c0_36] : memref<1x1x1x32xf32, #tpu.memory_space<vmem>>, vector<1x1x1x32xf32>
    %50 = vector.shape_cast %49 : vector<1x1x1x32xf32> to vector<1x32xf32>
    %cst_37 = arith.constant dense<0.000000e+00> : vector<2xf32>
    %51 = vector.multi_reduction <add>, %46, %cst_37 [1] : vector<2x32xf32> to vector<2xf32>
    %52 = vector.shape_cast %51 : vector<2xf32> to vector<2x1xf32>
    %cst_38 = arith.constant 3.200000e+01 : f32
    %53 = vector.broadcast %cst_38 : f32 to vector<2x1xf32>
    %54 = arith.divf %52, %53 : vector<2x1xf32>
    %55 = arith.mulf %46, %46 : vector<2x32xf32>
    %cst_39 = arith.constant dense<0.000000e+00> : vector<2xf32>
    %56 = vector.multi_reduction <add>, %55, %cst_39 [1] : vector<2x32xf32> to vector<2xf32>
    %57 = vector.shape_cast %56 : vector<2xf32> to vector<2x1xf32>
    %cst_40 = arith.constant 3.200000e+01 : f32
    %58 = vector.broadcast %cst_40 : f32 to vector<2x1xf32>
    %59 = arith.divf %57, %58 : vector<2x1xf32>
    %60 = arith.mulf %54, %54 : vector<2x1xf32>
    %61 = arith.subf %59, %60 : vector<2x1xf32>
    %cst_41 = arith.constant 0.000000e+00 : f32
    %62 = vector.broadcast %cst_41 : f32 to vector<2x1xf32>
    %63 = arith.maximumf %61, %62 : vector<2x1xf32>
    %64 = vector.broadcast %54 : vector<2x1xf32> to vector<2x32xf32>
    %65 = arith.subf %46, %64 : vector<2x32xf32>
    %cst_42 = arith.constant 9.99999974E-6 : f32
    %66 = vector.broadcast %cst_42 : f32 to vector<2x1xf32>
    %67 = arith.addf %63, %66 : vector<2x1xf32>
    %68 = math.rsqrt %67 : vector<2x1xf32>
    %69 = vector.broadcast %68 : vector<2x1xf32> to vector<2x32xf32>
    %70 = arith.mulf %65, %69 : vector<2x32xf32>
    %71 = vector.broadcast %48 : vector<1x32xf32> to vector<2x32xf32>
    %72 = arith.mulf %70, %71 : vector<2x32xf32>
    %73 = vector.broadcast %50 : vector<1x32xf32> to vector<2x32xf32>
    %74 = arith.addf %72, %73 : vector<2x32xf32>
    %cst_43 = arith.constant 0.000000e+00 : f32
    %75 = vector.broadcast %cst_43 : f32 to vector<2x32xf32>
    %76 = arith.maximumf %74, %75 : vector<2x32xf32>
    %77 = arith.truncf %76 : vector<2x32xf32> to vector<2x32xbf16>
    %c0_44 = arith.constant 0 : index
    %c0_45 = arith.constant 0 : index
    %c0_46 = arith.constant 0 : index
    %78 = vector.load %arg12[%c0_44, %c0_45, %c0_46] : memref<1x2x32xbf16, #tpu.memory_space<vmem>>, vector<1x2x32xbf16>
    %79 = vector.shape_cast %78 : vector<1x2x32xbf16> to vector<2x32xbf16>
    %80 = vector.shape_cast %77 : vector<2x32xbf16> to vector<1x2x32xbf16>
    tpu.vector_store %arg12[%c0_44, %c0_45, %c0_46], %80 {strides = array<i32>} : memref<1x2x32xbf16, #tpu.memory_space<vmem>>, vector<1x2x32xbf16>,
    %c0_47 = arith.constant 0 : index
    %c0_48 = arith.constant 0 : index
    %c0_49 = arith.constant 0 : index
    %81 = vector.load %arg10[%c0_47, %c0_48, %c0_49] : memref<1x32x32xbf16, #tpu.memory_space<vmem>>, vector<1x32x32xbf16>
    %82 = vector.shape_cast %81 : vector<1x32x32xbf16> to vector<32x32xbf16>
    %cst_50 = arith.constant dense<0.000000e+00> : vector<2x32xf32>
    %83 = tpu.matmul %77, %82, %cst_50 {dimension_numbers = #tpu.dot_dimension_numbers<[1], [0], [0], [1], [0, 0, 1, 1], [], []>} : vector<2x32xbf16>, vector<32x32xbf16>, vector<2x32xf32> -> vector<2x32xf32>
    %c0_51 = arith.constant 0 : index
    %c0_52 = arith.constant 0 : index
    %c0_53 = arith.constant 0 : index
    %84 = vector.load %arg11[%c0_51, %c0_52, %c0_53] : memref<1x1x32xf32, #tpu.memory_space<vmem>>, vector<1x1x32xf32>
    %85 = vector.shape_cast %84 : vector<1x1x32xf32> to vector<1x32xf32>
    %86 = vector.broadcast %85 : vector<1x32xf32> to vector<2x32xf32>
    %87 = arith.addf %83, %86 : vector<2x32xf32>
    %c0_54 = arith.constant 0 : index
    %c0_55 = arith.constant 0 : index
    %c0_56 = arith.constant 0 : index
    %88 = vector.load %arg13[%c0_54, %c0_55, %c0_56] : memref<1x2x32xf32, #tpu.memory_space<vmem>>, vector<1x2x32xf32>
    %89 = vector.shape_cast %88 : vector<1x2x32xf32> to vector<2x32xf32>
    %90 = vector.shape_cast %87 : vector<2x32xf32> to vector<1x2x32xf32>
    tpu.vector_store %arg13[%c0_54, %c0_55, %c0_56], %90 {strides = array<i32>} : memref<1x2x32xf32, #tpu.memory_space<vmem>>, vector<1x2x32xf32>,
    return
  }
  func.func @transform_0(%arg0: i32) -> (i32, i32) {
    %c0_i32 = arith.constant 0 : i32
    %c0_i32_0 = arith.constant 0 : i32
    %c0_i32_1 = arith.constant 0 : i32
    return %c0_i32, %c0_i32_0 : i32, i32
  }
  func.func @transform_1(%arg0: i32) -> (i32, i32, i32) {
    %c0_i32 = arith.constant 0 : i32
    %c0_i32_0 = arith.constant 0 : i32
    %c0_i32_1 = arith.constant 0 : i32
    return %arg0, %c0_i32, %c0_i32_0 : i32, i32, i32
  }
  func.func @transform_2(%arg0: i32) -> (i32, i32, i32) {
    %c0_i32 = arith.constant 0 : i32
    %c0_i32_0 = arith.constant 0 : i32
    %c0_i32_1 = arith.constant 0 : i32
    return %arg0, %c0_i32, %c0_i32_0 : i32, i32, i32
  }
  func.func @transform_3(%arg0: i32) -> (i32, i32, i32) {
    %c0_i32 = arith.constant 0 : i32
    %c0_i32_0 = arith.constant 0 : i32
    %c0_i32_1 = arith.constant 0 : i32
    return %arg0, %c0_i32, %c0_i32_0 : i32, i32, i32
  }
  func.func @transform_4(%arg0: i32) -> (i32, i32, i32) {
    %c0_i32 = arith.constant 0 : i32
    %c0_i32_0 = arith.constant 0 : i32
    %c0_i32_1 = arith.constant 0 : i32
    return %arg0, %c0_i32, %c0_i32_0 : i32, i32, i32
  }
  func.func @transform_5(%arg0: i32) -> (i32, i32, i32, i32) {
    %c0_i32 = arith.constant 0 : i32
    %c0_i32_0 = arith.constant 0 : i32
    %c0_i32_1 = arith.constant 0 : i32
    %c0_i32_2 = arith.constant 0 : i32
    return %arg0, %c0_i32, %c0_i32_0, %c0_i32_1 : i32, i32, i32, i32
  }
  func.func @transform_6(%arg0: i32) -> (i32, i32, i32, i32) {
    %c0_i32 = arith.constant 0 : i32
    %c0_i32_0 = arith.constant 0 : i32
    %c0_i32_1 = arith.constant 0 : i32
    %c0_i32_2 = arith.constant 0 : i32
    return %arg0, %c0_i32, %c0_i32_0, %c0_i32_1 : i32, i32, i32, i32
  }
  func.func @transform_7(%arg0: i32) -> (i32, i32, i32, i32) {
    %c0_i32 = arith.constant 0 : i32
    %c0_i32_0 = arith.constant 0 : i32
    %c0_i32_1 = arith.constant 0 : i32
    %c0_i32_2 = arith.constant 0 : i32
    return %arg0, %c0_i32, %c0_i32_0, %c0_i32_1 : i32, i32, i32, i32
  }
  func.func @transform_8(%arg0: i32) -> (i32, i32, i32, i32) {
    %c0_i32 = arith.constant 0 : i32
    %c0_i32_0 = arith.constant 0 : i32
    %c0_i32_1 = arith.constant 0 : i32
    %c0_i32_2 = arith.constant 0 : i32
    return %arg0, %c0_i32, %c0_i32_0, %c0_i32_1 : i32, i32, i32, i32
  }
  func.func @transform_9(%arg0: i32) -> (i32, i32, i32) {
    %c0_i32 = arith.constant 0 : i32
    %c0_i32_0 = arith.constant 0 : i32
    %c0_i32_1 = arith.constant 0 : i32
    return %arg0, %c0_i32, %c0_i32_0 : i32, i32, i32
  }
  func.func @transform_10(%arg0: i32) -> (i32, i32, i32) {
    %c0_i32 = arith.constant 0 : i32
    %c0_i32_0 = arith.constant 0 : i32
    %c0_i32_1 = arith.constant 0 : i32
    return %arg0, %c0_i32, %c0_i32_0 : i32, i32, i32
  }
  func.func @transform_11(%arg0: i32) -> (i32, i32, i32) {
    %c0_i32 = arith.constant 0 : i32
    %c0_i32_0 = arith.constant 0 : i32
    %c0_i32_1 = arith.constant 0 : i32
    return %arg0, %c0_i32, %c0_i32_0 : i32, i32, i32
  }
  func.func @transform_12(%arg0: i32) -> (i32, i32, i32) {
    %c0_i32 = arith.constant 0 : i32
    %c0_i32_0 = arith.constant 0 : i32
    %c0_i32_1 = arith.constant 0 : i32
    return %arg0, %c0_i32, %c0_i32_0 : i32, i32, i32
  }
}

</mosaic_0001>

<llo_original>
// kernel: tpu_custom_call.1
$region0: #{tpu_custom_call.1}
  #allocation0 [shape = 'u32[]', space=smem, size = 0x4, offset = 0x4, fixed_abs, tag = 'smem constant byte address 0x4 - core index']
  #allocation1 [shape = 'u32[144,128]{1,0:T(1,128)}', space=vmem, size = 0x12000, scoped, tag = 'internal scratch']
  %s0 = inlined_call_operand.hbm [shape: f32[2,8], index: 0, kind: input, shape index: {}]
  %s1 = inlined_call_operand.hbm [shape: bf16[3,8,32], index: 1, kind: input, shape index: {}]
  %s2 = inlined_call_operand.vmem [shape: f32[3,1,32], index: 2, kind: input, shape index: {}]
  %s3 = inlined_call_operand.hbm [shape: f32[3,1,32], index: 3, kind: input, shape index: {}]
  %s4 = inlined_call_operand.vmem [shape: f32[3,1,32], index: 4, kind: input, shape index: {}]
  %s5 = inlined_call_operand.hbm [shape: bf16[3,1,32,32], index: 5, kind: input, shape index: {}]
  %s6 = inlined_call_operand.vmem [shape: f32[3,1,1,32], index: 6, kind: input, shape index: {}]
  %s7 = inlined_call_operand.vmem [shape: f32[3,1,1,32], index: 7, kind: input, shape index: {}]
  %s8 = inlined_call_operand.hbm [shape: f32[3,1,1,32], index: 8, kind: input, shape index: {}]
  %s9 = inlined_call_operand.hbm [shape: bf16[3,32,32], index: 9, kind: input, shape index: {}]
  %s10 = inlined_call_operand.vmem [shape: f32[3,1,32], index: 10, kind: input, shape index: {}]
  %s11 = inlined_call_operand.hbm [shape: bf16[3,2,32], index: 11, kind: output, shape index: {0}]
  %s12 = inlined_call_operand.hbm [shape: f32[3,2,32], index: 12, kind: output, shape index: {1}]
  %13 = xla_tuple %s11, %s12
  %s14 = sld [smem:[#allocation0]]
  $region109: #{tpu_custom_call.1} parent=0
    _
  %s16 = ssub.s32 1, %s14
  %s17 = scalar_select 0, %s16, %s14
  $region1: #{tpu_custom_call.1} parent=0
    #allocation2 [shape = 'u8[1024]{0}', space=vmem, size = 0x400, scoped, tag = 'input window, operand 0, single buffered']
    #allocation3 [shape = 's32[2]{0}', space=sflag, size = 0x8, scoped, tag = 'scoped memory for tpu_custom_call.1']
    #allocation4 [shape = 's32[2]{0}', space=sflag, size = 0x8, scoped, tag = 'scoped memory for tpu_custom_call.1']
    #allocation5 [shape = 'u8[4096]{0}', space=vmem, size = 0x1000, scoped, tag = 'input window, operand 1']
    #allocation6 [shape = 's32[2]{0}', space=sflag, size = 0x8, scoped, tag = 'scoped memory for tpu_custom_call.1']
    #allocation7 [shape = 'u8[1024]{0}', space=vmem, size = 0x400, scoped, tag = 'input window, operand 3']
    #allocation8 [shape = 'u8[16384]{0}', space=vmem, size = 0x4000, scoped, tag = 'input window, operand 5']
    #allocation9 [shape = 's32[2]{0}', space=sflag, size = 0x8, scoped, tag = 'scoped memory for tpu_custom_call.1']
    #allocation10 [shape = 'u8[1024]{0}', space=vmem, size = 0x400, scoped, tag = 'input window, operand 8']
    #allocation11 [shape = 'u8[16384]{0}', space=vmem, size = 0x4000, scoped, tag = 'input window, operand 9']
    #allocation12 [shape = 's32[2]{0}', space=sflag, size = 0x8, scoped, tag = 'scoped memory for tpu_custom_call.1']
    #allocation13 [shape = 'u8[1024]{0}', space=vmem, size = 0x400, scoped, tag = 'output window, operand 0']
    #allocation14 [shape = 'u8[2048]{0}', space=vmem, size = 0x800, scoped, tag = 'output window, operand 1']
    #allocation15 [shape = 's32[2]{0}', space=sflag, size = 0x8, scoped, tag = 'scoped memory for tpu_custom_call.1']
    %18 = vsyncpa [#allocation3], 0
    %19 = vsyncpa [#allocation6], 0
    %s20 = scalar_lea.sflag [#allocation6], 1
    %21 = vsyncpa %s20, 0
    %22 = vsyncpa [#allocation9], 0
    %s23 = scalar_lea.sflag [#allocation9], 1
    %24 = vsyncpa %s23, 0
    %25 = vsyncpa [#allocation12], 0
    %s26 = scalar_lea.sflag [#allocation12], 1
    %27 = vsyncpa %s26, 0
    %28 = vsyncpa [#allocation4], 0
    %s29 = scalar_lea.sflag [#allocation4], 1
    %30 = vsyncpa %s29, 0
    %31 = vsyncpa [#allocation15], 0
    %s32 = scalar_lea.sflag [#allocation15], 1
    %33 = vsyncpa %s32, 0
    loop: start=0, step=1, limit=5
    $region2: #{tpu_custom_call.1} parent=1 // loop_pre_header
      _
    $region3: #{tpu_custom_call.1} parent=1 // loop_header
      %s35 = sphi 0, %s39
      %p36 = scmp.ge.s32.totalorder %s35, 5
      %s43 = sphi 0, %s43
      %s45 = sphi 0, %s43
      %s46 = sphi 0, %s45
      %s60 = sphi 0, %s46
      %s66 = sphi 0, %s68
      %s69 = sphi 0, %s66
      %s70 = sphi 0, %s69
      %s86 = sphi 0, %s70
      %s92 = sphi 0, %s94
      %s95 = sphi 0, %s92
      %s96 = sphi 0, %s95
      %s112 = sphi 0, %s96
      %s118 = sphi 0, %s120
      %s121 = sphi 0, %s118
      %s122 = sphi 0, %s121
      %s138 = sphi 0, %s122
      %s144 = sphi 0, %s146
      %s147 = sphi 0, %s144
      %s148 = sphi 0, %s147
      %s164 = sphi 0, %s148
      %s170 = sphi 0, %s172
      %s173 = sphi 0, %s170
      %s174 = sphi 0, %s173
      %s190 = sphi 0, %s174
      %s196 = sphi 0, %s198
      %s199 = sphi 0, %s196
      %s200 = sphi 0, %s199
      %s216 = sphi 0, %s200
      %s222 = sphi 0, %s224
      %s225 = sphi 0, %s222
      %s226 = sphi 0, %s225
      %s242 = sphi 0, %s226
      %s248 = sphi 0, %s250
      %s251 = sphi 0, %s248
      %s252 = sphi 0, %s251
      %s268 = sphi 0, %s252
      %s274 = sphi 0, %s276
      %s277 = sphi 0, %s274
      %s278 = sphi 0, %s277
      %s294 = sphi 0, %s278
      %s300 = sphi 0, %s302
      %s303 = sphi 0, %s300
      %s304 = sphi 0, %s303
      %s320 = sphi 0, %s304
      %s326 = sphi 0, %s328
      %s329 = sphi 0, %s326
      %s330 = sphi 0, %s329
      %s346 = sphi 0, %s330
      %s352 = sphi 0, %s354
      %s355 = sphi 0, %s352
      %s356 = sphi 0, %s355
      %s372 = sphi 0, %s356
    $region4: #{tpu_custom_call.1} parent=1 // loop_header_branch
      %38 = sbr.rel (%p36) target = $region8
    $region5: #{tpu_custom_call.1} parent=1 // loop_body
      %s40 = ssub.s32 %s35, 1
      %s41 = ssub.s32 %s35, 2
      %s42 = sadd.s32 %s35, 1
      %s44 = sadd.s32 %s43, 1
      %p47 = scmp.eq.s32.totalorder %s35, 2
      %p48 = scmp.ne.s32.totalorder %s43, %s45
      %p49 = scmp.eq.s32.totalorder %s35, 0
      %p50 = por %p48, %p49
      %p51 = scmp.ne.s32.totalorder %s43, %s45
      %p52 = scmp.eq.s32.totalorder %s40, 2
      %p53 = por %p51, %p52
      %p54 = scmp.ne.s32.totalorder %s45, %s46
      %p55 = scmp.eq.s32.totalorder %s40, 0
      %p56 = por %p54, %p55
      %p57 = scmp.ne.s32.totalorder %s45, %s46
      %p58 = scmp.eq.s32.totalorder %s41, 2
      %p59 = por %p57, %p58
      %p61 = scmp.ne.s32.totalorder %s46, %s60
      %p62 = scmp.eq.s32.totalorder %s41, 0
      %p63 = por %p61, %p62
      %s64 = ssub.s32 %s35, %s42
      %p65 = scmp.eq.s32.totalorder %s64, 0
      %s67 = sadd.s32 %s66, 1
      %s68 = scalar_select %p65, %s66, %s67
      %p71 = pneg %p65
      %p72 = scmp.eq.s32.totalorder %s35, 2
      %p73 = por %p71, %p72
      %p74 = scmp.ne.s32.totalorder %s66, %s69
      %p75 = scmp.eq.s32.totalorder %s35, 0
      %p76 = por %p74, %p75
      %p77 = scmp.ne.s32.totalorder %s66, %s69
      %p78 = scmp.eq.s32.totalorder %s40, 2
      %p79 = por %p77, %p78
      %p80 = scmp.ne.s32.totalorder %s69, %s70
      %p81 = scmp.eq.s32.totalorder %s40, 0
      %p82 = por %p80, %p81
      %p83 = scmp.ne.s32.totalorder %s69, %s70
      %p84 = scmp.eq.s32.totalorder %s41, 2
      %p85 = por %p83, %p84
      %p87 = scmp.ne.s32.totalorder %s70, %s86
      %p88 = scmp.eq.s32.totalorder %s41, 0
      %p89 = por %p87, %p88
      %s90 = ssub.s32 %s35, %s42
      %p91 = scmp.eq.s32.totalorder %s90, 0
      %s93 = sadd.s32 %s92, 1
      %s94 = scalar_select %p91, %s92, %s93
      %p97 = pneg %p91
      %p98 = scmp.eq.s32.totalorder %s35, 2
      %p99 = por %p97, %p98
      %p100 = scmp.ne.s32.totalorder %s92, %s95
      %p101 = scmp.eq.s32.totalorder %s35, 0
      %p102 = por %p100, %p101
      %p103 = scmp.ne.s32.totalorder %s92, %s95
      %p104 = scmp.eq.s32.totalorder %s40, 2
      %p105 = por %p103, %p104
      %p106 = scmp.ne.s32.totalorder %s95, %s96
      %p107 = scmp.eq.s32.totalorder %s40, 0
      %p108 = por %p106, %p107
      %p109 = scmp.ne.s32.totalorder %s95, %s96
      %p110 = scmp.eq.s32.totalorder %s41, 2
      %p111 = por %p109, %p110
      %p113 = scmp.ne.s32.totalorder %s96, %s112
      %p114 = scmp.eq.s32.totalorder %s41, 0
      %p115 = por %p113, %p114
      %s116 = ssub.s32 %s35, %s42
      %p117 = scmp.eq.s32.totalorder %s116, 0
      %s119 = sadd.s32 %s118, 1
      %s120 = scalar_select %p117, %s118, %s119
      %p123 = pneg %p117
      %p124 = scmp.eq.s32.totalorder %s35, 2
      %p125 = por %p123, %p124
      %p126 = scmp.ne.s32.totalorder %s118, %s121
      %p127 = scmp.eq.s32.totalorder %s35, 0
      %p128 = por %p126, %p127
      %p129 = scmp.ne.s32.totalorder %s118, %s121
      %p130 = scmp.eq.s32.totalorder %s40, 2
      %p131 = por %p129, %p130
      %p132 = scmp.ne.s32.totalorder %s121, %s122
      %p133 = scmp.eq.s32.totalorder %s40, 0
      %p134 = por %p132, %p133
      %p135 = scmp.ne.s32.totalorder %s121, %s122
      %p136 = scmp.eq.s32.totalorder %s41, 2
      %p137 = por %p135, %p136
      %p139 = scmp.ne.s32.totalorder %s122, %s138
      %p140 = scmp.eq.s32.totalorder %s41, 0
      %p141 = por %p139, %p140
      %s142 = ssub.s32 %s35, %s42
      %p143 = scmp.eq.s32.totalorder %s142, 0
      %s145 = sadd.s32 %s144, 1
      %s146 = scalar_select %p143, %s144, %s145
      %p149 = pneg %p143
      %p150 = scmp.eq.s32.totalorder %s35, 2
      %p151 = por %p149, %p150
      %p152 = scmp.ne.s32.totalorder %s144, %s147
      %p153 = scmp.eq.s32.totalorder %s35, 0
      %p154 = por %p152, %p153
      %p155 = scmp.ne.s32.totalorder %s144, %s147
      %p156 = scmp.eq.s32.totalorder %s40, 2
      %p157 = por %p155, %p156
      %p158 = scmp.ne.s32.totalorder %s147, %s148
      %p159 = scmp.eq.s32.totalorder %s40, 0
      %p160 = por %p158, %p159
      %p161 = scmp.ne.s32.totalorder %s147, %s148
      %p162 = scmp.eq.s32.totalorder %s41, 2
      %p163 = por %p161, %p162
      %p165 = scmp.ne.s32.totalorder %s148, %s164
      %p166 = scmp.eq.s32.totalorder %s41, 0
      %p167 = por %p165, %p166
      %s168 = ssub.s32 %s35, %s42
      %p169 = scmp.eq.s32.totalorder %s168, 0
      %s171 = sadd.s32 %s170, 1
      %s172 = scalar_select %p169, %s170, %s171
      %p175 = pneg %p169
      %p176 = scmp.eq.s32.totalorder %s35, 2
      %p177 = por %p175, %p176
      %p178 = scmp.ne.s32.totalorder %s170, %s173
      %p179 = scmp.eq.s32.totalorder %s35, 0
      %p180 = por %p178, %p179
      %p181 = scmp.ne.s32.totalorder %s170, %s173
      %p182 = scmp.eq.s32.totalorder %s40, 2
      %p183 = por %p181, %p182
      %p184 = scmp.ne.s32.totalorder %s173, %s174
      %p185 = scmp.eq.s32.totalorder %s40, 0
      %p186 = por %p184, %p185
      %p187 = scmp.ne.s32.totalorder %s173, %s174
      %p188 = scmp.eq.s32.totalorder %s41, 2
      %p189 = por %p187, %p188
      %p191 = scmp.ne.s32.totalorder %s174, %s190
      %p192 = scmp.eq.s32.totalorder %s41, 0
      %p193 = por %p191, %p192
      %s194 = ssub.s32 %s35, %s42
      %p195 = scmp.eq.s32.totalorder %s194, 0
      %s197 = sadd.s32 %s196, 1
      %s198 = scalar_select %p195, %s196, %s197
      %p201 = pneg %p195
      %p202 = scmp.eq.s32.totalorder %s35, 2
      %p203 = por %p201, %p202
      %p204 = scmp.ne.s32.totalorder %s196, %s199
      %p205 = scmp.eq.s32.totalorder %s35, 0
      %p206 = por %p204, %p205
      %p207 = scmp.ne.s32.totalorder %s196, %s199
      %p208 = scmp.eq.s32.totalorder %s40, 2
      %p209 = por %p207, %p208
      %p210 = scmp.ne.s32.totalorder %s199, %s200
      %p211 = scmp.eq.s32.totalorder %s40, 0
      %p212 = por %p210, %p211
      %p213 = scmp.ne.s32.totalorder %s199, %s200
      %p214 = scmp.eq.s32.totalorder %s41, 2
      %p215 = por %p213, %p214
      %p217 = scmp.ne.s32.totalorder %s200, %s216
      %p218 = scmp.eq.s32.totalorder %s41, 0
      %p219 = por %p217, %p218
      %s220 = ssub.s32 %s35, %s42
      %p221 = scmp.eq.s32.totalorder %s220, 0
      %s223 = sadd.s32 %s222, 1
      %s224 = scalar_select %p221, %s222, %s223
      %p227 = pneg %p221
      %p228 = scmp.eq.s32.totalorder %s35, 2
      %p229 = por %p227, %p228
      %p230 = scmp.ne.s32.totalorder %s222, %s225
      %p231 = scmp.eq.s32.totalorder %s35, 0
      %p232 = por %p230, %p231
      %p233 = scmp.ne.s32.totalorder %s222, %s225
      %p234 = scmp.eq.s32.totalorder %s40, 2
      %p235 = por %p233, %p234
      %p236 = scmp.ne.s32.totalorder %s225, %s226
      %p237 = scmp.eq.s32.totalorder %s40, 0
      %p238 = por %p236, %p237
      %p239 = scmp.ne.s32.totalorder %s225, %s226
      %p240 = scmp.eq.s32.totalorder %s41, 2
      %p241 = por %p239, %p240
      %p243 = scmp.ne.s32.totalorder %s226, %s242
      %p244 = scmp.eq.s32.totalorder %s41, 0
      %p245 = por %p243, %p244
      %s246 = ssub.s32 %s35, %s42
      %p247 = scmp.eq.s32.totalorder %s246, 0
      %s249 = sadd.s32 %s248, 1
      %s250 = scalar_select %p247, %s248, %s249
      %p253 = pneg %p247
      %p254 = scmp.eq.s32.totalorder %s35, 2
      %p255 = por %p253, %p254
      %p256 = scmp.ne.s32.totalorder %s248, %s251
      %p257 = scmp.eq.s32.totalorder %s35, 0
      %p258 = por %p256, %p257
      %p259 = scmp.ne.s32.totalorder %s248, %s251
      %p260 = scmp.eq.s32.totalorder %s40, 2
      %p261 = por %p259, %p260
      %p262 = scmp.ne.s32.totalorder %s251, %s252
      %p263 = scmp.eq.s32.totalorder %s40, 0
      %p264 = por %p262, %p263
      %p265 = scmp.ne.s32.totalorder %s251, %s252
      %p266 = scmp.eq.s32.totalorder %s41, 2
      %p267 = por %p265, %p266
      %p269 = scmp.ne.s32.totalorder %s252, %s268
      %p270 = scmp.eq.s32.totalorder %s41, 0
      %p271 = por %p269, %p270
      %s272 = ssub.s32 %s35, %s42
      %p273 = scmp.eq.s32.totalorder %s272, 0
      %s275 = sadd.s32 %s274, 1
      %s276 = scalar_select %p273, %s274, %s275
      %p279 = pneg %p273
      %p280 = scmp.eq.s32.totalorder %s35, 2
      %p281 = por %p279, %p280
      %p282 = scmp.ne.s32.totalorder %s274, %s277
      %p283 = scmp.eq.s32.totalorder %s35, 0
      %p284 = por %p282, %p283
      %p285 = scmp.ne.s32.totalorder %s274, %s277
      %p286 = scmp.eq.s32.totalorder %s40, 2
      %p287 = por %p285, %p286
      %p288 = scmp.ne.s32.totalorder %s277, %s278
      %p289 = scmp.eq.s32.totalorder %s40, 0
      %p290 = por %p288, %p289
      %p291 = scmp.ne.s32.totalorder %s277, %s278
      %p292 = scmp.eq.s32.totalorder %s41, 2
      %p293 = por %p291, %p292
      %p295 = scmp.ne.s32.totalorder %s278, %s294
      %p296 = scmp.eq.s32.totalorder %s41, 0
      %p297 = por %p295, %p296
      %s298 = ssub.s32 %s35, %s42
      %p299 = scmp.eq.s32.totalorder %s298, 0
      %s301 = sadd.s32 %s300, 1
      %s302 = scalar_select %p299, %s300, %s301
      %p305 = pneg %p299
      %p306 = scmp.eq.s32.totalorder %s35, 2
      %p307 = por %p305, %p306
      %p308 = scmp.ne.s32.totalorder %s300, %s303
      %p309 = scmp.eq.s32.totalorder %s35, 0
      %p310 = por %p308, %p309
      %p311 = scmp.ne.s32.totalorder %s300, %s303
      %p312 = scmp.eq.s32.totalorder %s40, 2
      %p313 = por %p311, %p312
      %p314 = scmp.ne.s32.totalorder %s303, %s304
      %p315 = scmp.eq.s32.totalorder %s40, 0
      %p316 = por %p314, %p315
      %p317 = scmp.ne.s32.totalorder %s303, %s304
      %p318 = scmp.eq.s32.totalorder %s41, 2
      %p319 = por %p317, %p318
      %p321 = scmp.ne.s32.totalorder %s304, %s320
      %p322 = scmp.eq.s32.totalorder %s41, 0
      %p323 = por %p321, %p322
      %s324 = ssub.s32 %s35, %s42
      %p325 = scmp.eq.s32.totalorder %s324, 0
      %s327 = sadd.s32 %s326, 1
      %s328 = scalar_select %p325, %s326, %s327
      %p331 = pneg %p325
      %p332 = scmp.eq.s32.totalorder %s35, 2
      %p333 = por %p331, %p332
      %p334 = scmp.ne.s32.totalorder %s326, %s329
      %p335 = scmp.eq.s32.totalorder %s35, 0
      %p336 = por %p334, %p335
      %p337 = scmp.ne.s32.totalorder %s326, %s329
      %p338 = scmp.eq.s32.totalorder %s40, 2
      %p339 = por %p337, %p338
      %p340 = scmp.ne.s32.totalorder %s329, %s330
      %p341 = scmp.eq.s32.totalorder %s40, 0
      %p342 = por %p340, %p341
      %p343 = scmp.ne.s32.totalorder %s329, %s330
      %p344 = scmp.eq.s32.totalorder %s41, 2
      %p345 = por %p343, %p344
      %p347 = scmp.ne.s32.totalorder %s330, %s346
      %p348 = scmp.eq.s32.totalorder %s41, 0
      %p349 = por %p347, %p348
      %s350 = ssub.s32 %s35, %s42
      %p351 = scmp.eq.s32.totalorder %s350, 0
      %s353 = sadd.s32 %s352, 1
      %s354 = scalar_select %p351, %s352, %s353
      %p357 = pneg %p351
      %p358 = scmp.eq.s32.totalorder %s35, 2
      %p359 = por %p357, %p358
      %p360 = scmp.ne.s32.totalorder %s352, %s355
      %p361 = scmp.eq.s32.totalorder %s35, 0
      %p362 = por %p360, %p361
      %p363 = scmp.ne.s32.totalorder %s352, %s355
      %p364 = scmp.eq.s32.totalorder %s40, 2
      %p365 = por %p363, %p364
      %p366 = scmp.ne.s32.totalorder %s355, %s356
      %p367 = scmp.eq.s32.totalorder %s40, 0
      %p368 = por %p366, %p367
      %p369 = scmp.ne.s32.totalorder %s355, %s356
      %p370 = scmp.eq.s32.totalorder %s41, 2
      %p371 = por %p369, %p370
      %p373 = scmp.ne.s32.totalorder %s356, %s372
      %p374 = scmp.eq.s32.totalorder %s41, 0
      %p375 = por %p373, %p374
      %p376 = scmp.le.s32.totalorder 1, %s35
      %p377 = scmp.lt.s32.totalorder %s35, 4
      %p378 = pnand %p376, %p377
      %p379 = pneg %p378
      // Predicated region
      $region9: #{tpu_custom_call.1} parent=5 // pred_check
        _
      $region10: #{tpu_custom_call.1} parent=5 // pred_check_branch
        %381 = sbr.rel (%p378) target = $region12
      $region11: #{tpu_custom_call.1} parent=5 // pred_region
        %s382 = ssub.s32 %s35, 1
        // Predicated region
        $region13: #{tpu_custom_call.1} parent=11 // pred_check
          %p383 = pneg %p56
        $region14: #{tpu_custom_call.1} parent=11 // pred_check_branch
          %385 = sbr.rel (%p383) target = $region16
        $region15: #{tpu_custom_call.1} parent=11 // pred_region
          %s387 = ssub.s32 32, 32
          %388 = vsyncadd [#allocation3], %s387
          %s390 = sshll.u32 [#allocation2], 4
          %s391 = int_to_ptr.vmem [resolvable:$true] %s390
          %393 = dma.hbm_to_vmem [thread:$0]  %s0, 32, %s391, [#allocation3]
        $region16: #{tpu_custom_call.1} parent=11 // pred_fallthru
          _
      $region12: #{tpu_custom_call.1} parent=5 // pred_fallthru
        _
      %p394 = scmp.lt.s32.totalorder %s35, 3
      // Predicated region
      $region17: #{tpu_custom_call.1} parent=5 // pred_check
        %p395 = pneg %p394
      $region18: #{tpu_custom_call.1} parent=5 // pred_check_branch
        %397 = sbr.rel (%p395) target = $region20
      $region19: #{tpu_custom_call.1} parent=5 // pred_region
        // Predicated region
        $region21: #{tpu_custom_call.1} parent=19 // pred_check
          %p398 = pneg %p76
        $region22: #{tpu_custom_call.1} parent=19 // pred_check_branch
          %400 = sbr.rel (%p398) target = $region24
        $region23: #{tpu_custom_call.1} parent=19 // pred_region
          %s401 = sand.u32 %s35, 1
          %s402 = scalar_lea.sflag [#allocation6], %s401
          %s403 = sand.u32 %s66, 1
          %s404 = smul.addr %s403, 4
          %s405 = scalar_lea.vmem [#allocation5], %s404
          %s407 = ssub.s32 64, 64
          %408 = vsyncadd %s402, %s407
          %s409 = smul.addr %s35, 64
          %s410 = scalar_lea.hbm %s1, %s409
          %s412 = sshll.u32 %s405, 4
          %s413 = int_to_ptr.vmem [resolvable:$true] %s412
          %415 = dma.hbm_to_vmem [thread:$0]  %s410, 64, %s413, %s402
        $region24: #{tpu_custom_call.1} parent=19 // pred_fallthru
          _
        // Predicated region
        $region25: #{tpu_custom_call.1} parent=19 // pred_check
          %p416 = pneg %p102
        $region26: #{tpu_custom_call.1} parent=19 // pred_check_branch
          %418 = sbr.rel (%p416) target = $region28
        $region27: #{tpu_custom_call.1} parent=19 // pred_region
          %p419 = scmp.lt.s32.totalorder %s35, 2
          %s420 = scalar_select %p419, %s35, 2
          %s421 = scalar_lea.vmem %s2, %s420
        $region28: #{tpu_custom_call.1} parent=19 // pred_fallthru
          _
        // Predicated region
        $region29: #{tpu_custom_call.1} parent=19 // pred_check
          %p422 = pneg %p128
        $region30: #{tpu_custom_call.1} parent=19 // pred_check_branch
          %424 = sbr.rel (%p422) target = $region32
        $region31: #{tpu_custom_call.1} parent=19 // pred_region
          %s425 = sand.u32 %s35, 1
          %s426 = scalar_lea.sflag [#allocation6], %s425
          %s427 = sand.u32 %s118, 1
          %s428 = scalar_lea.vmem [#allocation7], %s427
          %s430 = ssub.s32 16, 16
          %431 = vsyncadd %s426, %s430
          %s432 = smul.addr %s35, 16
          %s433 = scalar_lea.hbm %s3, %s432
          %s435 = sshll.u32 %s428, 4
          %s436 = int_to_ptr.vmem [resolvable:$true] %s435
          %438 = dma.hbm_to_vmem [thread:$0]  %s433, 16, %s436, %s426
        $region32: #{tpu_custom_call.1} parent=19 // pred_fallthru
          _
        // Predicated region
        $region33: #{tpu_custom_call.1} parent=19 // pred_check
          %p439 = pneg %p154
        $region34: #{tpu_custom_call.1} parent=19 // pred_check_branch
          %441 = sbr.rel (%p439) target = $region36
        $region35: #{tpu_custom_call.1} parent=19 // pred_region
          %p442 = scmp.lt.s32.totalorder %s35, 2
          %s443 = scalar_select %p442, %s35, 2
          %s444 = scalar_lea.vmem %s4, %s443
        $region36: #{tpu_custom_call.1} parent=19 // pred_fallthru
          _
        // Predicated region
        $region37: #{tpu_custom_call.1} parent=19 // pred_check
          %p445 = pneg %p180
        $region38: #{tpu_custom_call.1} parent=19 // pred_check_branch
          %447 = sbr.rel (%p445) target = $region40
        $region39: #{tpu_custom_call.1} parent=19 // pred_region
          %s448 = sand.u32 %s35, 1
          %s449 = scalar_lea.sflag [#allocation9], %s448
          %s450 = sand.u32 %s170, 1
          %s451 = smul.addr %s450, 16
          %s452 = scalar_lea.vmem [#allocation8], %s451
          %s454 = ssub.s32 256, 256
          %455 = vsyncadd %s449, %s454
          %s456 = smul.addr %s35, 4
          %s457 = smul.addr %s456, 64
          %s458 = scalar_lea.hbm %s5, %s457
          %s459 = sshll.u32 %s452, 4
          %s460 = int_to_ptr.vmem [resolvable:$true] %s459
          %465 = dma.hbm_to_vmem [thread:$0]  %s458, 256, %s460, %s449, 64, 64, 4
        $region40: #{tpu_custom_call.1} parent=19 // pred_fallthru
          _
        // Predicated region
        $region41: #{tpu_custom_call.1} parent=19 // pred_check
          %p466 = pneg %p206
        $region42: #{tpu_custom_call.1} parent=19 // pred_check_branch
          %468 = sbr.rel (%p466) target = $region44
        $region43: #{tpu_custom_call.1} parent=19 // pred_region
          %p469 = scmp.lt.s32.totalorder %s35, 2
          %s470 = scalar_select %p469, %s35, 2
          %s471 = scalar_lea.vmem %s6, %s470
        $region44: #{tpu_custom_call.1} parent=19 // pred_fallthru
          _
        // Predicated region
        $region45: #{tpu_custom_call.1} parent=19 // pred_check
          %p472 = pneg %p232
        $region46: #{tpu_custom_call.1} parent=19 // pred_check_branch
          %474 = sbr.rel (%p472) target = $region48
        $region47: #{tpu_custom_call.1} parent=19 // pred_region
          %p475 = scmp.lt.s32.totalorder %s35, 2
          %s476 = scalar_select %p475, %s35, 2
          %s477 = scalar_lea.vmem %s7, %s476
        $region48: #{tpu_custom_call.1} parent=19 // pred_fallthru
          _
        // Predicated region
        $region49: #{tpu_custom_call.1} parent=19 // pred_check
          %p478 = pneg %p258
        $region50: #{tpu_custom_call.1} parent=19 // pred_check_branch
          %480 = sbr.rel (%p478) target = $region52
        $region51: #{tpu_custom_call.1} parent=19 // pred_region
          %s481 = sand.u32 %s35, 1
          %s482 = scalar_lea.sflag [#allocation9], %s481
          %s483 = sand.u32 %s248, 1
          %s484 = scalar_lea.vmem [#allocation10], %s483
          %s486 = ssub.s32 16, 16
          %487 = vsyncadd %s482, %s486
          %s488 = smul.addr %s35, 16
          %s489 = scalar_lea.hbm %s8, %s488
          %s491 = sshll.u32 %s484, 4
          %s492 = int_to_ptr.vmem [resolvable:$true] %s491
          %494 = dma.hbm_to_vmem [thread:$0]  %s489, 16, %s492, %s482
        $region52: #{tpu_custom_call.1} parent=19 // pred_fallthru
          _
        // Predicated region
        $region53: #{tpu_custom_call.1} parent=19 // pred_check
          %p495 = pneg %p284
        $region54: #{tpu_custom_call.1} parent=19 // pred_check_branch
          %497 = sbr.rel (%p495) target = $region56
        $region55: #{tpu_custom_call.1} parent=19 // pred_region
          %s498 = sand.u32 %s274, 1
          %s499 = scalar_lea.sflag [#allocation12], %s498
          %s500 = sand.u32 %s274, 1
          %s501 = smul.addr %s500, 16
          %s502 = scalar_lea.vmem [#allocation11], %s501
          %s504 = ssub.s32 256, 256
          %505 = vsyncadd %s499, %s504
          %s506 = smul.addr %s35, 4
          %s507 = smul.addr %s506, 64
          %s508 = scalar_lea.hbm %s9, %s507
          %s509 = sshll.u32 %s502, 4
          %s510 = int_to_ptr.vmem [resolvable:$true] %s509
          %515 = dma.hbm_to_vmem [thread:$0]  %s508, 256, %s510, %s499, 64, 64, 4
        $region56: #{tpu_custom_call.1} parent=19 // pred_fallthru
          _
        // Predicated region
        $region57: #{tpu_custom_call.1} parent=19 // pred_check
          %p516 = pneg %p310
        $region58: #{tpu_custom_call.1} parent=19 // pred_check_branch
          %518 = sbr.rel (%p516) target = $region60
        $region59: #{tpu_custom_call.1} parent=19 // pred_region
          %p519 = scmp.lt.s32.totalorder %s35, 2
          %s520 = scalar_select %p519, %s35, 2
          %s521 = scalar_lea.vmem %s10, %s520
        $region60: #{tpu_custom_call.1} parent=19 // pred_fallthru
          _
      $region20: #{tpu_custom_call.1} parent=5 // pred_fallthru
        _
      %p522 = scmp.le.s32.totalorder 1, %s35
      %p523 = scmp.lt.s32.totalorder %s35, 4
      %p524 = pnand %p522, %p523
      %p525 = pneg %p524
      // Predicated region
      $region61: #{tpu_custom_call.1} parent=5 // pred_check
        _
      $region62: #{tpu_custom_call.1} parent=5 // pred_check_branch
        %527 = sbr.rel (%p524) target = $region64
      $region63: #{tpu_custom_call.1} parent=5 // pred_region
        %s528 = ssub.s32 %s35, 1
        // Predicated region
        $region65: #{tpu_custom_call.1} parent=63 // pred_check
          %p529 = pneg %p56
        $region66: #{tpu_custom_call.1} parent=63 // pred_check_branch
          %531 = sbr.rel (%p529) target = $region68
        $region67: #{tpu_custom_call.1} parent=63 // pred_region
          %532 = dma.done [#allocation3], 32
        $region68: #{tpu_custom_call.1} parent=63 // pred_fallthru
          _
        %s533 = sand.u32 %s40, 1
        %s534 = scalar_lea.sflag [#allocation6], %s533
        %s535 = sand.u32 %s69, 1
        %s536 = smul.addr %s535, 4
        %s537 = scalar_lea.vmem [#allocation5], %s536
        // Predicated region
        $region69: #{tpu_custom_call.1} parent=63 // pred_check
          %p538 = pneg %p82
        $region70: #{tpu_custom_call.1} parent=63 // pred_check_branch
          %540 = sbr.rel (%p538) target = $region72
        $region71: #{tpu_custom_call.1} parent=63 // pred_region
          %541 = dma.done %s534, 64
        $region72: #{tpu_custom_call.1} parent=63 // pred_fallthru
          _
        %s542 = sand.u32 %s40, 1
        %s543 = scalar_lea.sflag [#allocation6], %s542
        %s544 = sand.u32 %s121, 1
        %s545 = scalar_lea.vmem [#allocation7], %s544
        // Predicated region
        $region73: #{tpu_custom_call.1} parent=63 // pred_check
          %p546 = pneg %p134
        $region74: #{tpu_custom_call.1} parent=63 // pred_check_branch
          %548 = sbr.rel (%p546) target = $region76
        $region75: #{tpu_custom_call.1} parent=63 // pred_region
          %549 = dma.done %s543, 16
        $region76: #{tpu_custom_call.1} parent=63 // pred_fallthru
          _
        %s550 = sand.u32 %s40, 1
        %s551 = scalar_lea.sflag [#allocation9], %s550
        %s552 = sand.u32 %s173, 1
        %s553 = smul.addr %s552, 16
        %s554 = scalar_lea.vmem [#allocation8], %s553
        // Predicated region
        $region77: #{tpu_custom_call.1} parent=63 // pred_check
          %p555 = pneg %p186
        $region78: #{tpu_custom_call.1} parent=63 // pred_check_branch
          %557 = sbr.rel (%p555) target = $region80
        $region79: #{tpu_custom_call.1} parent=63 // pred_region
          %558 = dma.done %s551, 256
        $region80: #{tpu_custom_call.1} parent=63 // pred_fallthru
          _
        %s559 = sand.u32 %s40, 1
        %s560 = scalar_lea.sflag [#allocation9], %s559
        %s561 = sand.u32 %s251, 1
        %s562 = scalar_lea.vmem [#allocation10], %s561
        // Predicated region
        $region81: #{tpu_custom_call.1} parent=63 // pred_check
          %p563 = pneg %p264
        $region82: #{tpu_custom_call.1} parent=63 // pred_check_branch
          %565 = sbr.rel (%p563) target = $region84
        $region83: #{tpu_custom_call.1} parent=63 // pred_region
          %566 = dma.done %s560, 16
        $region84: #{tpu_custom_call.1} parent=63 // pred_fallthru
          _
        %s567 = sand.u32 %s277, 1
        %s568 = scalar_lea.sflag [#allocation12], %s567
        %s569 = sand.u32 %s277, 1
        %s570 = smul.addr %s569, 16
        %s571 = scalar_lea.vmem [#allocation11], %s570
        // Predicated region
        $region85: #{tpu_custom_call.1} parent=63 // pred_check
          %p572 = pneg %p290
        $region86: #{tpu_custom_call.1} parent=63 // pred_check_branch
          %574 = sbr.rel (%p572) target = $region88
        $region87: #{tpu_custom_call.1} parent=63 // pred_region
          %575 = dma.done %s568, 256
        $region88: #{tpu_custom_call.1} parent=63 // pred_fallthru
          _
        %p576 = pneg %p56
        %p577 = pneg %p53
        %s578 = sand.u32 %s40, 1
        %s579 = scalar_lea.sflag [#allocation6], %s578
        %s580 = sand.u32 %s69, 1
        %s581 = smul.addr %s580, 4
        %s582 = scalar_lea.vmem [#allocation5], %s581
        %p583 = pneg %p82
        %p584 = pneg %p79
        %p585 = scmp.lt.s32.totalorder %s40, 2
        %s586 = scalar_select %p585, %s40, 2
        %s587 = scalar_lea.vmem %s2, %s586
        %p588 = pneg %p108
        %p589 = pneg %p105
        %s590 = sand.u32 %s40, 1
        %s591 = scalar_lea.sflag [#allocation6], %s590
        %s592 = sand.u32 %s121, 1
        %s593 = scalar_lea.vmem [#allocation7], %s592
        %p594 = pneg %p134
        %p595 = pneg %p131
        %p596 = scmp.lt.s32.totalorder %s40, 2
        %s597 = scalar_select %p596, %s40, 2
        %s598 = scalar_lea.vmem %s4, %s597
        %p599 = pneg %p160
        %p600 = pneg %p157
        %s601 = sand.u32 %s40, 1
        %s602 = scalar_lea.sflag [#allocation9], %s601
        %s603 = sand.u32 %s173, 1
        %s604 = smul.addr %s603, 16
        %s605 = scalar_lea.vmem [#allocation8], %s604
        %p606 = pneg %p186
        %p607 = pneg %p183
        %p608 = scmp.lt.s32.totalorder %s40, 2
        %s609 = scalar_select %p608, %s40, 2
        %s610 = scalar_lea.vmem %s6, %s609
        %p611 = pneg %p212
        %p612 = pneg %p209
        %p613 = scmp.lt.s32.totalorder %s40, 2
        %s614 = scalar_select %p613, %s40, 2
        %s615 = scalar_lea.vmem %s7, %s614
        %p616 = pneg %p238
        %p617 = pneg %p235
        %s618 = sand.u32 %s40, 1
        %s619 = scalar_lea.sflag [#allocation9], %s618
        %s620 = sand.u32 %s251, 1
        %s621 = scalar_lea.vmem [#allocation10], %s620
        %p622 = pneg %p264
        %p623 = pneg %p261
        %s624 = sand.u32 %s277, 1
        %s625 = scalar_lea.sflag [#allocation12], %s624
        %s626 = sand.u32 %s277, 1
        %s627 = smul.addr %s626, 16
        %s628 = scalar_lea.vmem [#allocation11], %s627
        %p629 = pneg %p290
        %p630 = pneg %p287
        %p631 = scmp.lt.s32.totalorder %s40, 2
        %s632 = scalar_select %p631, %s40, 2
        %s633 = scalar_lea.vmem %s10, %s632
        %p634 = pneg %p316
        %p635 = pneg %p313
        %p636 = pneg %p342
        %p637 = pneg %p339
        %s638 = sand.u32 %s329, 1
        %s639 = scalar_lea.sflag [#allocation4], %s638
        %s640 = sand.u32 %s329, 1
        %s641 = scalar_lea.vmem [#allocation13], %s640
        %p642 = pneg %p368
        %p643 = pneg %p365
        %s644 = sand.u32 %s355, 1
        %s645 = scalar_lea.sflag [#allocation15], %s644
        %s646 = sand.u32 %s355, 1
        %s647 = smul.addr %s646, 2
        %s648 = scalar_lea.vmem [#allocation14], %s647
        %p649 = scmp.lt.s32.totalorder %s40, 2
        %s650 = scalar_select %p649, %s40, 2
        %s651 = scalar_lea.vmem %s2, %s650
        %p652 = scmp.lt.s32.totalorder %s40, 2
        %s653 = scalar_select %p652, %s40, 2
        %s654 = scalar_lea.vmem %s4, %s653
        %p655 = scmp.lt.s32.totalorder %s40, 2
        %s656 = scalar_select %p655, %s40, 2
        %s657 = scalar_lea.vmem %s6, %s656
        %p658 = scmp.lt.s32.totalorder %s40, 2
        %s659 = scalar_select %p658, %s40, 2
        %s660 = scalar_lea.vmem %s7, %s659
        %p661 = scmp.lt.s32.totalorder %s40, 2
        %s662 = scalar_select %p661, %s40, 2
        %s663 = scalar_lea.vmem %s10, %s662
        %v665 = vld [vmem:[#allocation2] sm:$0x3]
        %v666 = vpack.c.bf16 %v665, %v665
        %v667 = vld [vmem:[%s537] sm:$0xf]
        %v668 = vld [vmem:[%s651] sm:$0x1]
        %v670 = vlaneseq
        %v671 = vshrl.u32 %v670, 7
        %v672 = vsub.s32 0, %v671
        %v673 = vrot.slane %v668, %v672
        %vm675 = vcmask 64512
        %v677 = vsel %vm675, %v666, 0
        %vm679 = vcmask 1043456
        %v681 = vsel %vm679, %v667, 0
        %683 = vmatprep.subr.bf16.mxu0 0
        %684 = vmatpush1.bf16.msra.mxu0 0
        %685 = vmatprep.subr.bf16.mxu0 0
        %686 = vmatpush1.bf16.msra.mxu0 0
        %687 = vmatprep.subr.bf16.mxu0 0
        %688 = vmatpush1.bf16.msra.mxu0 0
        %689 = vmatprep.subr.bf16.mxu0 0
        %690 = vmatpush1.bf16.msra.mxu0 0
        %691 = vmatprep.subr.bf16.mxu0 0
        %692 = vmatpush1.bf16.msra.mxu0 0
        %693 = vmatprep.subr.bf16.mxu0 0
        %694 = vmatpush1.bf16.msra.mxu0 0
        %695 = vmatprep.subr.bf16.mxu0 0
        %696 = vmatpush1.bf16.msra.mxu0 0
        %697 = vmatprep.subr.bf16.mxu0 0
        %698 = vmatpush1.bf16.msra.mxu0 %v681
        %699 = vmatprep.subr.bf16.mxu0 0
        %700 = vmatpush2.bf16.msra.mxu0 0
        %701 = vmatprep.subr.bf16.mxu0 0
        %702 = vmatpush2.bf16.msra.mxu0 0
        %703 = vmatprep.subr.bf16.mxu0 0
        %704 = vmatpush2.bf16.msra.mxu0 0
        %705 = vmatprep.subr.bf16.mxu0 0
        %706 = vmatpush2.bf16.msra.mxu0 0
        %707 = vmatprep.subr.bf16.mxu0 0
        %708 = vmatpush2.bf16.msra.mxu0 0
        %709 = vmatprep.subr.bf16.mxu0 0
        %710 = vmatpush2.bf16.msra.mxu0 0
        %711 = vmatprep.subr.bf16.mxu0 0
        %712 = vmatpush2.bf16.msra.mxu0 0
        %713 = vmatprep.subr.bf16.mxu0 0
        %714 = vmatpush2.bf16.msra.mxu0 0
        %715 = vmatprep.mubr.bf16.mxu0 0
        %716 = vmatmul.mubr.bf16.gmra.mxu0 %v677
        %v717 = vpop.f32.mrf.mxu0
        %v718 = vadd.f32 %v673, %v717
        %v719 = vpop.f32.mrf.mxu0
        %v720 = vpop.f32.mrf.mxu0
        %v721 = vpop.f32.mrf.mxu0
        %722 = vdwg.mxu0
        %v723 = vld [vmem:[%s545] sm:$0x1]
        %v724 = vld [vmem:[%s654] sm:$0x1]
        %vm725 = vcmask 254976
        %v726 = vsel %vm725, %v718, 0.0
        %727 = vadd.xlane.f32.xlu0 %v726
        %v728 = vpop.xlane.xlu0 %727
        %v729 = vrcp.pop 32.0
        %v730 = vmul.f32 %v728, %v729
        %v731 = vmul.f32 %v718, %v718
        %v732 = vsel %vm725, %v731, 0.0
        %733 = vadd.xlane.f32.xlu0 %v732
        %v734 = vpop.xlane.xlu0 %733
        %v735 = vmul.f32 %v734, %v729
        %v736 = vmul.f32 %v730, %v730
        %v737 = vsub.f32 %v735, %v736
        %v738 = vmax.f32 %v737, 0.0
        %v739 = vsub.f32 %v718, %v730
        %v740 = vadd.f32 %v738, 1e-05
        %v741 = vrsqrt.pop %v740
        %v742 = vmul.f32 %v739, %v741
        %v744 = vlaneseq
        %v745 = vshrl.u32 %v744, 7
        %v746 = vsub.s32 0, %v745
        %v747 = vrot.slane %v723, %v746
        %v749 = vmul.f32 %v742, %v747
        %v751 = vlaneseq
        %v752 = vshrl.u32 %v751, 7
        %v753 = vsub.s32 0, %v752
        %v754 = vrot.slane %v724, %v753
        %v756 = vadd.f32 %v749, %v754
        %v757 = vmax.f32 %v756, 0.0
        %v758 = vpack.c.bf16 %v757, %v757
        %v759 = vld [vmem:[%s554] sm:$0xf]
        %v760 = vld [vmem:[%s554 + $0x4] sm:$0xf]
        %v761 = vld [vmem:[%s554 + $0x8] sm:$0xf]
        %v762 = vld [vmem:[%s554 + $0xc] sm:$0xf]
        %v763 = vld [vmem:[%s657] sm:$0x1]
        %v765 = vlaneseq
        %v766 = vshrl.u32 %v765, 7
        %v767 = vsub.s32 0, %v766
        %v768 = vrot.slane %v763, %v767
        %v774 = vunpack.c.l.b16 %v759
        %v775 = vunpack.c.l.b16 %v760
        %v776 = vunpack.c.l.b16 %v761
        %v777 = vunpack.c.l.b16 %v762
        %v778 = vpack.c.b16 %v775, %v774
        %v779 = vpack.c.b16 %v777, %v776
        %vm782 = vcmask 261120
        %v784 = vsel %vm782, %v758, 0
        %786 = vmatprep.subr.bf16.mxu0 0
        %787 = vmatpush1.bf16.msra.mxu0 0
        %788 = vmatprep.subr.bf16.mxu0 0
        %789 = vmatpush1.bf16.msra.mxu0 0
        %790 = vmatprep.subr.bf16.mxu0 0
        %791 = vmatpush1.bf16.msra.mxu0 0
        %792 = vmatprep.subr.bf16.mxu0 0
        %793 = vmatpush1.bf16.msra.mxu0 0
        %794 = vmatprep.subr.bf16.mxu0 0
        %795 = vmatpush1.bf16.msra.mxu0 0
        %796 = vmatprep.subr.bf16.mxu0 0
        %797 = vmatpush1.bf16.msra.mxu0 0
        %798 = vmatprep.subr.bf16.mxu0 0
        %799 = vmatpush1.bf16.msra.mxu0 %v779
        %800 = vmatprep.subr.bf16.mxu0 0
        %801 = vmatpush1.bf16.msra.mxu0 %v778
        %802 = vmatprep.subr.bf16.mxu0 0
        %803 = vmatpush2.bf16.msra.mxu0 0
        %804 = vmatprep.subr.bf16.mxu0 0
        %805 = vmatpush2.bf16.msra.mxu0 0
        %806 = vmatprep.subr.bf16.mxu0 0
        %807 = vmatpush2.bf16.msra.mxu0 0
        %808 = vmatprep.subr.bf16.mxu0 0
        %809 = vmatpush2.bf16.msra.mxu0 0
        %810 = vmatprep.subr.bf16.mxu0 0
        %811 = vmatpush2.bf16.msra.mxu0 0
        %812 = vmatprep.subr.bf16.mxu0 0
        %813 = vmatpush2.bf16.msra.mxu0 0
        %814 = vmatprep.subr.bf16.mxu0 0
        %815 = vmatpush2.bf16.msra.mxu0 0
        %816 = vmatprep.subr.bf16.mxu0 0
        %817 = vmatpush2.bf16.msra.mxu0 0
        %818 = vmatprep.mubr.bf16.mxu0 0
        %819 = vmatmul.mubr.bf16.gmra.mxu0 %v784
        %v820 = vpop.f32.mrf.mxu0
        %v821 = vadd.f32 %v768, %v820
        %v822 = vpop.f32.mrf.mxu0
        %v823 = vpop.f32.mrf.mxu0
        %v824 = vpop.f32.mrf.mxu0
        %825 = vdwg.mxu0
        %v826 = vld [vmem:[%s660] sm:$0x1]
        %v827 = vld [vmem:[%s562] sm:$0x1]
        %v828 = vsel %vm725, %v821, 0.0
        %829 = vadd.xlane.f32.xlu0 %v828
        %v830 = vpop.xlane.xlu0 %829
        %v831 = vmul.f32 %v830, %v729
        %v832 = vmul.f32 %v821, %v821
        %v833 = vsel %vm725, %v832, 0.0
        %834 = vadd.xlane.f32.xlu0 %v833
        %v835 = vpop.xlane.xlu0 %834
        %v836 = vmul.f32 %v835, %v729
        %v837 = vmul.f32 %v831, %v831
        %v838 = vsub.f32 %v836, %v837
        %v839 = vmax.f32 %v838, 0.0
        %v840 = vsub.f32 %v821, %v831
        %v841 = vadd.f32 %v839, 1e-05
        %v842 = vrsqrt.pop %v841
        %v843 = vmul.f32 %v840, %v842
        %v845 = vlaneseq
        %v846 = vshrl.u32 %v845, 7
        %v847 = vsub.s32 0, %v846
        %v848 = vrot.slane %v826, %v847
        %v850 = vmul.f32 %v843, %v848
        %v852 = vlaneseq
        %v853 = vshrl.u32 %v852, 7
        %v854 = vsub.s32 0, %v853
        %v855 = vrot.slane %v827, %v854
        %v857 = vadd.f32 %v850, %v855
        %v858 = vmax.f32 %v857, 0.0
        %v859 = vpack.c.bf16 %v858, %v858
        %vm860 = vcmask 253952
        %861 = vst.msk [vmem:[%s641] sm:$0x1] %vm860, %v859
        %v862 = vld [vmem:[%s571] sm:$0xf]
        %v863 = vld [vmem:[%s571 + $0x4] sm:$0xf]
        %v864 = vld [vmem:[%s571 + $0x8] sm:$0xf]
        %v865 = vld [vmem:[%s571 + $0xc] sm:$0xf]
        %v866 = vld [vmem:[%s663] sm:$0x1]
        %v868 = vlaneseq
        %v869 = vshrl.u32 %v868, 7
        %v870 = vsub.s32 0, %v869
        %v871 = vrot.slane %v866, %v870
        %v877 = vunpack.c.l.b16 %v862
        %v878 = vunpack.c.l.b16 %v863
        %v879 = vunpack.c.l.b16 %v864
        %v880 = vunpack.c.l.b16 %v865
        %v881 = vpack.c.b16 %v878, %v877
        %v882 = vpack.c.b16 %v880, %v879
        %v886 = vsel %vm782, %v859, 0
        %888 = vmatprep.subr.bf16.mxu0 0
        %889 = vmatpush1.bf16.msra.mxu0 0
        %890 = vmatprep.subr.bf16.mxu0 0
        %891 = vmatpush1.bf16.msra.mxu0 0
        %892 = vmatprep.subr.bf16.mxu0 0
        %893 = vmatpush1.bf16.msra.mxu0 0
        %894 = vmatprep.subr.bf16.mxu0 0
        %895 = vmatpush1.bf16.msra.mxu0 0
        %896 = vmatprep.subr.bf16.mxu0 0
        %897 = vmatpush1.bf16.msra.mxu0 0
        %898 = vmatprep.subr.bf16.mxu0 0
        %899 = vmatpush1.bf16.msra.mxu0 0
        %900 = vmatprep.subr.bf16.mxu0 0
        %901 = vmatpush1.bf16.msra.mxu0 %v882
        %902 = vmatprep.subr.bf16.mxu0 0
        %903 = vmatpush1.bf16.msra.mxu0 %v881
        %904 = vmatprep.subr.bf16.mxu0 0
        %905 = vmatpush2.bf16.msra.mxu0 0
        %906 = vmatprep.subr.bf16.mxu0 0
        %907 = vmatpush2.bf16.msra.mxu0 0
        %908 = vmatprep.subr.bf16.mxu0 0
        %909 = vmatpush2.bf16.msra.mxu0 0
        %910 = vmatprep.subr.bf16.mxu0 0
        %911 = vmatpush2.bf16.msra.mxu0 0
        %912 = vmatprep.subr.bf16.mxu0 0
        %913 = vmatpush2.bf16.msra.mxu0 0
        %914 = vmatprep.subr.bf16.mxu0 0
        %915 = vmatpush2.bf16.msra.mxu0 0
        %916 = vmatprep.subr.bf16.mxu0 0
        %917 = vmatpush2.bf16.msra.mxu0 0
        %918 = vmatprep.subr.bf16.mxu0 0
        %919 = vmatpush2.bf16.msra.mxu0 0
        %920 = vmatprep.mubr.bf16.mxu0 0
        %921 = vmatmul.mubr.bf16.gmra.mxu0 %v886
        %v922 = vpop.f32.mrf.mxu0
        %v923 = vadd.f32 %v871, %v922
        %v924 = vpop.f32.mrf.mxu0
        %v925 = vpop.f32.mrf.mxu0
        %v926 = vpop.f32.mrf.mxu0
        %927 = vdwg.mxu0
        %928 = vst.msk [vmem:[%s648] sm:$0x3] %vm725, %v923
        %s929 = sand.u32 %s329, 1
        %s930 = scalar_lea.sflag [#allocation4], %s929
        %s931 = sand.u32 %s329, 1
        %s932 = scalar_lea.vmem [#allocation13], %s931
        %s933 = sand.u32 %s355, 1
        %s934 = scalar_lea.sflag [#allocation15], %s933
        %s935 = sand.u32 %s355, 1
        %s936 = smul.addr %s935, 2
        %s937 = scalar_lea.vmem [#allocation14], %s936
        // Predicated region
        $region89: #{tpu_custom_call.1} parent=63 // pred_check
          %p938 = pneg %p339
        $region90: #{tpu_custom_call.1} parent=63 // pred_check_branch
          %940 = sbr.rel (%p938) target = $region92
        $region91: #{tpu_custom_call.1} parent=63 // pred_region
          %s942 = ssub.s32 16, 16
          %943 = vsyncadd %s930, %s942
          %s944 = smul.addr %s40, 16
          %s945 = scalar_lea.hbm %s11, %s944
          %s947 = sshll.u32 %s932, 4
          %s948 = int_to_ptr.vmem [resolvable:$true] %s947
          %950 = dma.vmem_to_hbm [thread:$0]  %s948, 16, %s945, %s930
        $region92: #{tpu_custom_call.1} parent=63 // pred_fallthru
          _
        // Predicated region
        $region93: #{tpu_custom_call.1} parent=63 // pred_check
          %p951 = pneg %p365
        $region94: #{tpu_custom_call.1} parent=63 // pred_check_branch
          %953 = sbr.rel (%p951) target = $region96
        $region95: #{tpu_custom_call.1} parent=63 // pred_region
          %s955 = ssub.s32 32, 32
          %956 = vsyncadd %s934, %s955
          %s957 = smul.addr %s40, 32
          %s958 = scalar_lea.hbm %s12, %s957
          %s960 = sshll.u32 %s937, 4
          %s961 = int_to_ptr.vmem [resolvable:$true] %s960
          %963 = dma.vmem_to_hbm [thread:$0]  %s961, 32, %s958, %s934
        $region96: #{tpu_custom_call.1} parent=63 // pred_fallthru
          _
      $region64: #{tpu_custom_call.1} parent=5 // pred_fallthru
        _
      %p964 = scmp.le.s32.totalorder 2, %s35
      // Predicated region
      $region97: #{tpu_custom_call.1} parent=5 // pred_check
        %p965 = pneg %p964
      $region98: #{tpu_custom_call.1} parent=5 // pred_check_branch
        %967 = sbr.rel (%p965) target = $region100
      $region99: #{tpu_custom_call.1} parent=5 // pred_region
        %s968 = ssub.s32 %s35, 2
        // Predicated region
        $region101: #{tpu_custom_call.1} parent=99 // pred_check
          %p969 = pneg %p345
        $region102: #{tpu_custom_call.1} parent=99 // pred_check_branch
          %971 = sbr.rel (%p969) target = $region104
        $region103: #{tpu_custom_call.1} parent=99 // pred_region
          %s972 = sand.u32 %s330, 1
          %s973 = scalar_lea.sflag [#allocation4], %s972
          %s974 = sand.u32 %s330, 1
          %s975 = scalar_lea.vmem [#allocation13], %s974
          %976 = dma.done %s973, 16
        $region104: #{tpu_custom_call.1} parent=99 // pred_fallthru
          _
        // Predicated region
        $region105: #{tpu_custom_call.1} parent=99 // pred_check
          %p977 = pneg %p371
        $region106: #{tpu_custom_call.1} parent=99 // pred_check_branch
          %979 = sbr.rel (%p977) target = $region108
        $region107: #{tpu_custom_call.1} parent=99 // pred_region
          %s980 = sand.u32 %s356, 1
          %s981 = scalar_lea.sflag [#allocation15], %s980
          %s982 = sand.u32 %s356, 1
          %s983 = smul.addr %s982, 2
          %s984 = scalar_lea.vmem [#allocation14], %s983
          %985 = dma.done %s981, 32
        $region108: #{tpu_custom_call.1} parent=99 // pred_fallthru
          _
      $region100: #{tpu_custom_call.1} parent=5 // pred_fallthru
        _
    $region6: #{tpu_custom_call.1} parent=1 // loop_footer
      %s39 = sadd.s32 1, %s35
    $region7: #{tpu_custom_call.1} parent=1 // loop_footer_branch
      %34 = sbr.rel target = $region3
    $region8: #{tpu_custom_call.1} parent=1 // loop_exit
      _
    %986 = vsyncpa [#allocation3], 1
    %s987 = scalar_lea.sflag [#allocation3], 1
    %988 = vsyncpa %s987, 1
    %989 = vsyncpa [#allocation6], 1
    %s990 = scalar_lea.sflag [#allocation6], 1
    %991 = vsyncpa %s990, 1
    %992 = vsyncpa [#allocation9], 1
    %s993 = scalar_lea.sflag [#allocation9], 1
    %994 = vsyncpa %s993, 1
    %995 = vsyncpa [#allocation12], 1
    %s996 = scalar_lea.sflag [#allocation12], 1
    %997 = vsyncpa %s996, 1
    %998 = vsyncpa [#allocation4], 1
    %s999 = scalar_lea.sflag [#allocation4], 1
    %1000 = vsyncpa %s999, 1
    %1001 = vsyncpa [#allocation15], 1
    %s1002 = scalar_lea.sflag [#allocation15], 1
    %1003 = vsyncpa %s1002, 1

</llo_original>
